<compile_context>
chip_gen: v7x
topology: tpu7x:2x2x1
jax: 0.10.0
libtpu: 0.0.40
codegen_flags: <defaults>
</compile_context>

<pallas_src>
import jax
import jax.numpy as jnp
from jax.experimental import pallas as pl
from jax.experimental.pallas import tpu as pltpu


def _fm_kernel_reduce(x_ref, o_ref):
    # x_ref: (F, D, TB) block; o_ref: (1, TB) block (batch on the lane axis).
    x = x_ref[...].astype(jnp.float32)
    s = jnp.sum(x, axis=0)            # (D, TB): F-1 VPU adds (leading axis)
    square_of_sum = s * s             # (D, TB)
    sum_of_square = jnp.sum(x * x, axis=0)
    ix = square_of_sum - sum_of_square
    # Final D-reduction is a short sublane reduce; MXU offload (dot with ones)
    # is only worth it if profiling shows the XLU as the binding unit.
    o_ref[...] = (0.5 * jnp.sum(ix, axis=0, keepdims=True)).astype(o_ref.dtype)


def _fm_kernel_noreduce(x_ref, o_ref):
    # x_ref: (F, TB, D) block; o_ref: (TB, D) block.
    x = x_ref[...].astype(jnp.float32)
    s = jnp.sum(x, axis=0)            # (TB, D): F-1 VPU adds (leading axis)
    square_of_sum = s * s
    sum_of_square = jnp.sum(x * x, axis=0)
    o_ref[...] = (0.5 * (square_of_sum - sum_of_square)).astype(o_ref.dtype)


def _round_up(n, m):
    return ((n + m - 1) // m) * m


def factorization_machine(x, reduce_sum=True, block_b=512):
    """Pallas TPU FactorizationMachine.

    x: (batch, num_fields, embed_dim).
    Returns (batch, 1) if reduce_sum else (batch, embed_dim).
    """
    B, F, D = x.shape

    # Batch tile: multiple of 128 (lane-dense reduce output / aligned stores),
    # capped so a double-buffered f32 input tile fits comfortably in VMEM on
    # all generations (v7x has only 64 MiB physical VMEM).
    vmem_budget = 8 * 1024 * 1024                 # bytes for the input stream
    bytes_per_row = F * max(D, 128) * 4           # f32, lane-padded worst case
    tb_cap = max(128, (vmem_budget // (2 * bytes_per_row)) // 128 * 128)
    tb = min(_round_up(max(block_b, 128), 128), tb_cap, _round_up(B, 128))
    b_pad = _round_up(B, tb)
    n_blocks = b_pad // tb

    if reduce_sum:
        # Layout (F, D, B): batch is the lane axis -> lane-dense scalar output.
        xt = jnp.transpose(x, (1, 2, 0))
        if b_pad != B:
            xt = jnp.pad(xt, ((0, 0), (0, 0), (0, b_pad - B)))
        out = pl.pallas_call(
            _fm_kernel_reduce,
            out_shape=jax.ShapeDtypeStruct((1, b_pad), x.dtype),
            grid_spec=pltpu.PrefetchScalarGridSpec(
                num_scalar_prefetch=0,
                grid=(n_blocks,),
                in_specs=[pl.BlockSpec((F, D, tb), lambda b: (0, 0, b))],
                out_specs=pl.BlockSpec((1, tb), lambda b: (0, b)),
            ),
            compiler_params=pltpu.CompilerParams(
                dimension_semantics=("parallel",)),
        )(xt)
        return out[0, :B].reshape(B, 1)
    else:
        # Layout (F, B, D): output block (TB, D) matches the batched tile.
        xt = jnp.transpose(x, (1, 0, 2))
        if b_pad != B:
            xt = jnp.pad(xt, ((0, 0), (0, b_pad - B), (0, 0)))
        out = pl.pallas_call(
            _fm_kernel_noreduce,
            out_shape=jax.ShapeDtypeStruct((b_pad, D), x.dtype),
            grid_spec=pltpu.PrefetchScalarGridSpec(
                num_scalar_prefetch=0,
                grid=(n_blocks,),
                in_specs=[pl.BlockSpec((F, tb, D), lambda b: (0, b, 0))],
                out_specs=pl.BlockSpec((tb, D), lambda b: (b, 0)),
            ),
            compiler_params=pltpu.CompilerParams(
                dimension_semantics=("parallel",)),
        )(xt)
        return out[:B]


def _reference(x, reduce_sum=True):
    square_of_sum = jnp.sum(x, axis=1) ** 2
    sum_of_square = jnp.sum(x ** 2, axis=1)
    ix = square_of_sum - sum_of_square
    if reduce_sum:
        ix = jnp.sum(ix, axis=1, keepdims=True)
    return 0.5 * ix


if __name__ == "__main__":
    key = jax.random.PRNGKey(0)

    # Small shape matching the module's convention (batch, num_fields, embed).
    B, F, D = 2, 4, 32
    x = jax.random.normal(key, (B, F, D), dtype=jnp.float32)

    out = jax.block_until_ready(factorization_machine(x, reduce_sum=True))
    ref = _reference(x, reduce_sum=True)
    assert out.shape == (B, 1), out.shape
    assert jnp.allclose(out, ref, atol=1e-4, rtol=1e-4)

    out2 = jax.block_until_ready(factorization_machine(x, reduce_sum=False))
    ref2 = _reference(x, reduce_sum=False)
    assert out2.shape == (B, D), out2.shape
    assert jnp.allclose(out2, ref2, atol=1e-4, rtol=1e-4)

    # Exercise the multi-block + padding path (still tiny).
    B2 = 600
    x2 = jax.random.normal(jax.random.PRNGKey(1), (B2, F, D), dtype=jnp.float32)

    out3 = jax.block_until_ready(factorization_machine(x2, reduce_sum=True))
    ref3 = _reference(x2, reduce_sum=True)
    assert out3.shape == (B2, 1), out3.shape
    assert jnp.allclose(out3, ref3, atol=1e-4, rtol=1e-4)

    out4 = jax.block_until_ready(factorization_machine(x2, reduce_sum=False))
    ref4 = _reference(x2, reduce_sum=False)
    assert out4.shape == (B2, D), out4.shape
    assert jnp.allclose(out4, ref4, atol=1e-4, rtol=1e-4)

    print("KERNEL_OK")
</pallas_src>

<mosaic_0001>
module attributes {stable_mosaic.version = 11 : i64} {
  func.func @_fm_kernel_reduce(%arg0: i32, %arg1: memref<4x32x128xf32, #tpu.memory_space<vmem>>, %arg2: memref<1x128xf32, #tpu.memory_space<vmem>>) attributes {dimension_semantics = [#tpu.dimension_semantics<parallel>], iteration_bounds = array<i64: 1>, scalar_prefetch = 0 : i64, scratch_operands = 0 : i64, tpu.core_type = #tpu.core_type<tc>, window_params = [{transform_indices = @transform_0, window_bounds = array<i64: 4, 32, 128>}, {transform_indices = @transform_1, window_bounds = array<i64: 1, 128>}]} {
    %c0 = arith.constant 0 : index
    %c0_0 = arith.constant 0 : index
    %c0_1 = arith.constant 0 : index
    %0 = vector.load %arg1[%c0, %c0_0, %c0_1] : memref<4x32x128xf32, #tpu.memory_space<vmem>>, vector<4x32x128xf32>
    %cst = arith.constant dense<0.000000e+00> : vector<32x128xf32>
    %1 = vector.multi_reduction <add>, %0, %cst [0] : vector<4x32x128xf32> to vector<32x128xf32>
    %2 = arith.mulf %1, %1 : vector<32x128xf32>
    %3 = arith.mulf %0, %0 : vector<4x32x128xf32>
    %cst_2 = arith.constant dense<0.000000e+00> : vector<32x128xf32>
    %4 = vector.multi_reduction <add>, %3, %cst_2 [0] : vector<4x32x128xf32> to vector<32x128xf32>
    %5 = arith.subf %2, %4 : vector<32x128xf32>
    %cst_3 = arith.constant dense<0.000000e+00> : vector<128xf32>
    %6 = vector.multi_reduction <add>, %5, %cst_3 [0] : vector<32x128xf32> to vector<128xf32>
    %7 = vector.shape_cast %6 : vector<128xf32> to vector<1x128xf32>
    %cst_4 = arith.constant 5.000000e-01 : f32
    %8 = vector.broadcast %cst_4 : f32 to vector<1x128xf32>
    %9 = arith.mulf %8, %7 : vector<1x128xf32>
    %c0_5 = arith.constant 0 : index
    %c0_6 = arith.constant 0 : index
    %10 = vector.load %arg2[%c0_5, %c0_6] : memref<1x128xf32, #tpu.memory_space<vmem>>, vector<1x128xf32>
    tpu.vector_store %arg2[%c0_5, %c0_6], %9 {strides = array<i32>} : memref<1x128xf32, #tpu.memory_space<vmem>>, vector<1x128xf32>,
    return
  }
  func.func @transform_0(%arg0: i32) -> (i32, i32, i32) {
    %c0_i32 = arith.constant 0 : i32
    %c0_i32_0 = arith.constant 0 : i32
    %c0_i32_1 = arith.constant 0 : i32
    return %c0_i32, %c0_i32_0, %arg0 : i32, i32, i32
  }
  func.func @transform_1(%arg0: i32) -> (i32, i32) {
    %c0_i32 = arith.constant 0 : i32
    %c0_i32_0 = arith.constant 0 : i32
    return %c0_i32, %arg0 : i32, i32
  }
}

</mosaic_0001>

<llo_original>
// kernel: tpu_custom_call.1
$region0: #{tpu_custom_call.1}
  #allocation0 [shape = 'u32[]', space=smem, size = 0x4, offset = 0x4, fixed_abs, tag = 'smem constant byte address 0x4 - core index']
  #allocation1 [shape = 'u32[144,128]{1,0:T(1,128)}', space=vmem, size = 0x12000, scoped, tag = 'internal scratch']
  %s0 = inlined_call_operand.hbm [shape: f32[4,32,128], index: 0, kind: input, shape index: {}]
  %s1 = inlined_call_operand.hbm [shape: f32[1,128], index: 1, kind: output, shape index: {}]
  %s2 = sld [smem:[#allocation0]]
  $region18: #{tpu_custom_call.1} parent=0
    _
  %s4 = ssub.s32 1, %s2
  %s5 = scalar_select 0, %s4, %s2
  $region1: #{tpu_custom_call.1} parent=0
    #allocation2 [shape = 'u8[65536]{0}', space=vmem, size = 0x10000, scoped, tag = 'input window, operand 0, single buffered']
    #allocation3 [shape = 's32[1]{0}', space=sflag, size = 0x4, scoped, tag = 'scoped memory for tpu_custom_call.1']
    #allocation4 [shape = 's32[1]{0}', space=sflag, size = 0x4, scoped, tag = 'scoped memory for tpu_custom_call.1']
    #allocation5 [shape = 'u8[512]{0}', space=vmem, size = 0x400, scoped, tag = 'output window, operand 0, single buffered']
    %6 = vsyncpa [#allocation3], 0
    %7 = vsyncpa [#allocation4], 0
    // Predicated region
    $region2: #{tpu_custom_call.1} parent=1 // pred_check
      _
    $region3: #{tpu_custom_call.1} parent=1 // pred_check_branch
      %9 = sbr.rel (0) target = $region5
    $region4: #{tpu_custom_call.1} parent=1 // pred_region
      %s11 = ssub.s32 2048, 2048
      %12 = vsyncadd [#allocation3], %s11
      %s13 = sshll.u32 [#allocation2], 4
      %s14 = int_to_ptr.vmem [resolvable:$true] %s13
      %19 = dma.hbm_to_vmem [thread:$0]  %s0, 2048, %s14, [#allocation3], 128, 128, 8
    $region5: #{tpu_custom_call.1} parent=1 // pred_fallthru
      _
    // Predicated region
    $region6: #{tpu_custom_call.1} parent=1 // pred_check
      _
    $region7: #{tpu_custom_call.1} parent=1 // pred_check_branch
      %21 = sbr.rel (0) target = $region9
    $region8: #{tpu_custom_call.1} parent=1 // pred_region
      %22 = dma.done [#allocation3], 2048
    $region9: #{tpu_custom_call.1} parent=1 // pred_fallthru
      _
    %v23 = vld [vmem:[#allocation2] sm:$0xff]
    %v24 = vld [vmem:[#allocation2 + $0x8] sm:$0xff]
    %v25 = vld [vmem:[#allocation2 + $0x10] sm:$0xff]
    %v26 = vld [vmem:[#allocation2 + $0x18] sm:$0xff]
    %v27 = vld [vmem:[#allocation2 + $0x20] sm:$0xff]
    %v28 = vld [vmem:[#allocation2 + $0x28] sm:$0xff]
    %v29 = vld [vmem:[#allocation2 + $0x30] sm:$0xff]
    %v30 = vld [vmem:[#allocation2 + $0x38] sm:$0xff]
    %v31 = vld [vmem:[#allocation2 + $0x40] sm:$0xff]
    %v32 = vld [vmem:[#allocation2 + $0x48] sm:$0xff]
    %v33 = vld [vmem:[#allocation2 + $0x50] sm:$0xff]
    %v34 = vld [vmem:[#allocation2 + $0x58] sm:$0xff]
    %v35 = vld [vmem:[#allocation2 + $0x60] sm:$0xff]
    %v36 = vld [vmem:[#allocation2 + $0x68] sm:$0xff]
    %v37 = vld [vmem:[#allocation2 + $0x70] sm:$0xff]
    %v38 = vld [vmem:[#allocation2 + $0x78] sm:$0xff]
    %v39 = vadd.f32 %v23, %v27
    %v40 = vadd.f32 %v39, %v31
    %v41 = vadd.f32 %v40, %v35
    %v42 = vadd.f32 %v24, %v28
    %v43 = vadd.f32 %v42, %v32
    %v44 = vadd.f32 %v43, %v36
    %v45 = vadd.f32 %v25, %v29
    %v46 = vadd.f32 %v45, %v33
    %v47 = vadd.f32 %v46, %v37
    %v48 = vadd.f32 %v26, %v30
    %v49 = vadd.f32 %v48, %v34
    %v50 = vadd.f32 %v49, %v38
    %v51 = vmul.f32 %v41, %v41
    %v52 = vmul.f32 %v44, %v44
    %v53 = vmul.f32 %v47, %v47
    %v54 = vmul.f32 %v50, %v50
    %v55 = vmul.f32 %v23, %v23
    %v56 = vmul.f32 %v24, %v24
    %v57 = vmul.f32 %v25, %v25
    %v58 = vmul.f32 %v26, %v26
    %v59 = vmul.f32 %v27, %v27
    %v60 = vmul.f32 %v28, %v28
    %v61 = vmul.f32 %v29, %v29
    %v62 = vmul.f32 %v30, %v30
    %v63 = vmul.f32 %v31, %v31
    %v64 = vmul.f32 %v32, %v32
    %v65 = vmul.f32 %v33, %v33
    %v66 = vmul.f32 %v34, %v34
    %v67 = vmul.f32 %v35, %v35
    %v68 = vmul.f32 %v36, %v36
    %v69 = vmul.f32 %v37, %v37
    %v70 = vmul.f32 %v38, %v38
    %v71 = vadd.f32 %v55, %v59
    %v72 = vadd.f32 %v71, %v63
    %v73 = vadd.f32 %v72, %v67
    %v74 = vadd.f32 %v56, %v60
    %v75 = vadd.f32 %v74, %v64
    %v76 = vadd.f32 %v75, %v68
    %v77 = vadd.f32 %v57, %v61
    %v78 = vadd.f32 %v77, %v65
    %v79 = vadd.f32 %v78, %v69
    %v80 = vadd.f32 %v58, %v62
    %v81 = vadd.f32 %v80, %v66
    %v82 = vadd.f32 %v81, %v70
    %v83 = vsub.f32 %v51, %v73
    %v84 = vsub.f32 %v52, %v76
    %v85 = vsub.f32 %v53, %v79
    %v86 = vsub.f32 %v54, %v82
    %v87 = vadd.f32 %v83, %v84
    %v88 = vadd.f32 %v87, %v85
    %v89 = vadd.f32 %v88, %v86
    %v90 = vrot.slane %v89, 4
    %v91 = vadd.f32 %v89, %v90
    %v92 = vrot.slane %v91, 2
    %v93 = vadd.f32 %v91, %v92
    %v94 = vrot.slane %v93, 1
    %v95 = vadd.f32 %v93, %v94
    %v96 = vmul.f32 %v95, 0.5
    %97 = vst [vmem:[#allocation5] sm:$0x1] %v96
    // Predicated region
    $region10: #{tpu_custom_call.1} parent=1 // pred_check
      _
    $region11: #{tpu_custom_call.1} parent=1 // pred_check_branch
      %99 = sbr.rel (0) target = $region13
    $region12: #{tpu_custom_call.1} parent=1 // pred_region
      %s101 = ssub.s32 16, 16
      %102 = vsyncadd [#allocation4], %s101
      %s104 = sshll.u32 [#allocation5], 4
      %s105 = int_to_ptr.vmem [resolvable:$true] %s104
      %107 = dma.vmem_to_hbm [thread:$0]  %s105, 16, %s1, [#allocation4]
    $region13: #{tpu_custom_call.1} parent=1 // pred_fallthru
      _
    // Predicated region
    $region14: #{tpu_custom_call.1} parent=1 // pred_check
      _
    $region15: #{tpu_custom_call.1} parent=1 // pred_check_branch
      %109 = sbr.rel (0) target = $region17
    $region16: #{tpu_custom_call.1} parent=1 // pred_region
      %110 = dma.done [#allocation4], 16
    $region17: #{tpu_custom_call.1} parent=1 // pred_fallthru
      _
    %111 = vsyncpa [#allocation3], 1
    %112 = vsyncpa [#allocation4], 1

</llo_original>
